<compile_context>
chip_gen: v5e
topology: v5e:2x2
jax: 0.10.0
libtpu: 0.0.40
codegen_flags: <defaults>
</compile_context>

<pallas_src>
import jax
import jax.numpy as jnp
from jax.experimental import pallas as pl
from jax.experimental.pallas import tpu as pltpu

IN_DIM = 28 * 28      # 784 (full-dim K block, no padding)
HID = 256
OUT_DIM = 10
OUT_PAD = 128         # lane-dense output slab; wrapper slices back to 10


def mlp_kernel(x_ref, w1_ref, b1_ref, w2_ref, b2_ref, w3_ref, b3_ref, o_ref):
    # f32 -> bf16 cast in-register (free filler under the MXU) instead of a
    # separate wrapper-side pad/cast pass over HBM.
    x = x_ref[...].astype(jnp.bfloat16)
    # Layer 1: [tb, 784]bf16 @ [784, 256]bf16 -> f32 acc; bias + ReLU in f32.
    h1 = jnp.dot(x, w1_ref[...], preferred_element_type=jnp.float32)
    h1 = jnp.maximum(h1 + b1_ref[...], 0.0)
    # Layer 2: Linear(256 -> 256) + ReLU (bf16 operands, f32 accumulate).
    h2 = jnp.dot(h1.astype(jnp.bfloat16), w2_ref[...],
                 preferred_element_type=jnp.float32)
    h2 = jnp.maximum(h2 + b2_ref[...], 0.0)
    # Layer 3: Linear(256 -> 128-padded); columns 10..127 carry zero weights.
    h3 = jnp.dot(h2.astype(jnp.bfloat16), w3_ref[...],
                 preferred_element_type=jnp.float32)
    # Lane-dense bf16 store (halves output writeback vs. f32).
    o_ref[...] = (h3 + b3_ref[...]).astype(o_ref.dtype)


def _round_up(n, m):
    return -(-n // m) * m


def _tensorcores_per_chip():
    """1 on v5e/v6e (single TensorCore), 2 on v7x.  Defaults to 1 if unknown."""
    try:
        kind = jax.devices()[0].device_kind.lower()
    except Exception:
        return 1
    return 2 if ("v7" in kind or "7x" in kind) else 1


def _pick_batch_tile(B, tb, n_cores):
    """Batch-tile heuristic.
    Single-TC chips: the grid is a serial loop, so use one tile if the whole
    batch fits (extra steps are pure ~0.35us overhead), else `tb`.
    v7x (2 TCs, 'parallel' batch axis): split moderate batches in two and keep
    the grid step count even so both cores get equal work.
    All tiles are multiples of 16 (bf16 (16,128) packed output tiles)."""
    tb = max(16, _round_up(tb, 16))
    B16 = _round_up(B, 16)
    if n_cores <= 1:
        return min(B16, tb)
    if B16 <= tb:
        if B16 >= 256:
            return _round_up(-(-B16 // 2), 16)   # two parallel steps
        return B16                               # tiny batch: single step
    steps = -(-B16 // tb)
    if steps % 2:
        steps += 1                               # even step count for 2 TCs
    return _round_up(-(-B16 // steps), 16)


def _vmem_limit_bytes(tb):
    """Explicit scoped-VMEM limit: double-buffered x/out tiles + resident bf16
    weights + headroom for the f32 intermediates.  Keeps large tiles working on
    v5e's 16 MiB default while staying under v7x's 64 MiB physical VMEM."""
    x_bytes = tb * IN_DIM * 4
    out_bytes = tb * OUT_PAD * 2
    w_bytes = (IN_DIM * HID + HID * HID + HID * OUT_PAD) * 2 \
        + (2 * HID + OUT_PAD) * 4
    inter = tb * (IN_DIM * 2 + 2 * HID * 4 + 2 * HID * 2 + OUT_PAD * 4)
    need = 2 * (x_bytes + out_bytes) + 2 * w_bytes + inter
    return int(min(max(32 << 20, int(1.5 * need)), 48 << 20))


def mlp_forward(x, kparams, *, tb=1024):
    """x: [B, 784] float32. kparams: output of prepare_params (bf16 weights)."""
    B = x.shape[0]
    tb_eff = _pick_batch_tile(B, tb, _tensorcores_per_chip())
    Bp = _round_up(B, tb_eff)

    w1, b1 = kparams["w1"], kparams["b1"]
    w2, b2 = kparams["w2"], kparams["b2"]
    w3, b3 = kparams["w3"], kparams["b3"]

    # Only pad batch rows when needed (no K padding, no wrapper-side cast).
    x_in = x if Bp == B else jnp.pad(x, ((0, Bp - B), (0, 0)))

    grid = (Bp // tb_eff,)
    # Weights/biases are ~0.6 MiB total in bf16 -> keep whole tensors resident
    # in VMEM every step; only x / out are tiled over the batch.
    full = lambda shape: pl.BlockSpec(shape, lambda i: (0, 0))

    flops = 2 * Bp * (IN_DIM * HID + HID * HID + HID * OUT_PAD)
    bytes_accessed = (
        Bp * IN_DIM * 4                                    # x (f32, unpadded)
        + (IN_DIM * HID + HID * HID + HID * OUT_PAD) * 2   # weights (bf16)
        + (HID + HID + OUT_PAD) * 4                        # biases (f32)
        + Bp * OUT_PAD * 2                                 # output (bf16)
    )

    out = pl.pallas_call(
        mlp_kernel,
        out_shape=jax.ShapeDtypeStruct((Bp, OUT_PAD), jnp.bfloat16),
        grid_spec=pltpu.PrefetchScalarGridSpec(
            num_scalar_prefetch=0,
            grid=grid,
            in_specs=[
                pl.BlockSpec((tb_eff, IN_DIM), lambda i: (i, 0)),  # x tile (f32)
                full((IN_DIM, HID)),                               # w1
                full((1, HID)),                                    # b1
                full((HID, HID)),                                  # w2
                full((1, HID)),                                    # b2
                full((HID, OUT_PAD)),                              # w3 (N-padded)
                full((1, OUT_PAD)),                                # b3 (N-padded)
            ],
            out_specs=pl.BlockSpec((tb_eff, OUT_PAD), lambda i: (i, 0)),
        ),
        compiler_params=pltpu.CompilerParams(
            dimension_semantics=("parallel",),
            vmem_limit_bytes=_vmem_limit_bytes(tb_eff)),
        cost_estimate=pl.CostEstimate(
            flops=flops, transcendentals=0, bytes_accessed=bytes_accessed),
    )(x_in, w1, b1, w2, b2, w3, b3)

    return out[:B, :OUT_DIM].astype(jnp.float32)


def init_params(key):
    """Deterministic init mirroring nn.Linear (stored transposed, f32, unpadded)."""
    ks = jax.random.split(key, 6)

    def linear(kw, kb, fan_in, fan_out):
        bound = 1.0 / jnp.sqrt(fan_in)
        # PyTorch stores weight as [out, in]; we keep [in, out] for x @ W.
        w = jax.random.uniform(kw, (fan_in, fan_out), jnp.float32, -bound, bound)
        b = jax.random.uniform(kb, (1, fan_out), jnp.float32, -bound, bound)
        return w, b

    w1, b1 = linear(ks[0], ks[1], IN_DIM, HID)
    w2, b2 = linear(ks[2], ks[3], HID, HID)
    w3, b3 = linear(ks[4], ks[5], HID, OUT_DIM)
    return {"w1": w1, "b1": b1, "w2": w2, "b2": b2, "w3": w3, "b3": b3}


def prepare_params(p):
    """One-time wrapper-side prep: zero-pad N of w3/b3 to 128 (lane-dense
    output), cast weights to bf16 for the MXU. Biases stay f32 (added in f32)."""
    w3 = jnp.zeros((HID, OUT_PAD), jnp.float32).at[:, :OUT_DIM].set(p["w3"])
    b3 = jnp.zeros((1, OUT_PAD), jnp.float32).at[:, :OUT_DIM].set(p["b3"])
    return {
        "w1": p["w1"].astype(jnp.bfloat16), "b1": p["b1"],
        "w2": p["w2"].astype(jnp.bfloat16), "b2": p["b2"],
        "w3": w3.astype(jnp.bfloat16), "b3": b3,
    }


def mlp_reference(x, p):
    h = jnp.maximum(x @ p["w1"] + p["b1"], 0.0)
    h = jnp.maximum(h @ p["w2"] + p["b2"], 0.0)
    return h @ p["w3"] + p["b3"]


if __name__ == "__main__":
    key = jax.random.PRNGKey(0)
    kx, kp = jax.random.split(key)

    params = init_params(kp)
    kparams = prepare_params(params)

    # Small batch (single grid step) and a ragged batch with a tiny forced tile
    # (multi-step grid + batch-row padding) to exercise both paths cheaply.
    for B, tb in ((16, 1024), (40, 16)):
        x = jax.random.normal(jax.random.fold_in(kx, B), (B, IN_DIM), jnp.float32)
        out = jax.block_until_ready(mlp_forward(x, kparams, tb=tb))
        ref = mlp_reference(x, params)
        assert out.shape == (B, OUT_DIM)
        # bf16 matmul operands + bf16 output store (f32 accumulation) vs. an
        # f32 reference: observed error is O(1e-3); 2e-2 keeps ample margin.
        assert jnp.allclose(out, ref, atol=2e-2, rtol=2e-2), f"mismatch at B={B}"

    print("KERNEL_OK")
</pallas_src>

<mosaic_0001>
module attributes {stable_mosaic.version = 11 : i64} {
  func.func @mlp_kernel(%arg0: i32, %arg1: memref<16x784xf32, #tpu.memory_space<vmem>>, %arg2: memref<784x256xbf16, #tpu.memory_space<vmem>>, %arg3: memref<1x256xf32, #tpu.memory_space<vmem>>, %arg4: memref<256x256xbf16, #tpu.memory_space<vmem>>, %arg5: memref<1x256xf32, #tpu.memory_space<vmem>>, %arg6: memref<256x128xbf16, #tpu.memory_space<vmem>>, %arg7: memref<1x128xf32, #tpu.memory_space<vmem>>, %arg8: memref<16x128xbf16, #tpu.memory_space<vmem>>) attributes {dimension_semantics = [#tpu.dimension_semantics<parallel>], iteration_bounds = array<i64: 1>, scalar_prefetch = 0 : i64, scratch_operands = 0 : i64, tpu.core_type = #tpu.core_type<tc>, window_params = [{transform_indices = @transform_0, window_bounds = array<i64: 16, 784>}, {pipeline_mode = #tpu.pipeline_mode<synchronous>, transform_indices = @transform_1, window_bounds = array<i64: 784, 256>}, {pipeline_mode = #tpu.pipeline_mode<synchronous>, transform_indices = @transform_2, window_bounds = array<i64: 1, 256>}, {pipeline_mode = #tpu.pipeline_mode<synchronous>, transform_indices = @transform_3, window_bounds = array<i64: 256, 256>}, {pipeline_mode = #tpu.pipeline_mode<synchronous>, transform_indices = @transform_4, window_bounds = array<i64: 1, 256>}, {pipeline_mode = #tpu.pipeline_mode<synchronous>, transform_indices = @transform_5, window_bounds = array<i64: 256, 128>}, {pipeline_mode = #tpu.pipeline_mode<synchronous>, transform_indices = @transform_6, window_bounds = array<i64: 1, 128>}, {transform_indices = @transform_7, window_bounds = array<i64: 16, 128>}]} {
    %c0 = arith.constant 0 : index
    %c0_0 = arith.constant 0 : index
    %0 = vector.load %arg1[%c0, %c0_0] : memref<16x784xf32, #tpu.memory_space<vmem>>, vector<16x784xf32>
    %1 = arith.truncf %0 : vector<16x784xf32> to vector<16x784xbf16>
    %c0_1 = arith.constant 0 : index
    %c0_2 = arith.constant 0 : index
    %2 = vector.load %arg2[%c0_1, %c0_2] : memref<784x256xbf16, #tpu.memory_space<vmem>>, vector<784x256xbf16>
    %cst = arith.constant dense<0.000000e+00> : vector<16x256xf32>
    %3 = tpu.matmul %1, %2, %cst {dimension_numbers = #tpu.dot_dimension_numbers<[1], [0], [0], [1], [0, 0, 1, 1], [], []>} : vector<16x784xbf16>, vector<784x256xbf16>, vector<16x256xf32> -> vector<16x256xf32>
    %c0_3 = arith.constant 0 : index
    %c0_4 = arith.constant 0 : index
    %4 = vector.load %arg3[%c0_3, %c0_4] : memref<1x256xf32, #tpu.memory_space<vmem>>, vector<1x256xf32>
    %5 = vector.broadcast %4 : vector<1x256xf32> to vector<16x256xf32>
    %6 = arith.addf %3, %5 : vector<16x256xf32>
    %cst_5 = arith.constant 0.000000e+00 : f32
    %7 = vector.broadcast %cst_5 : f32 to vector<16x256xf32>
    %8 = arith.maximumf %6, %7 : vector<16x256xf32>
    %9 = arith.truncf %8 : vector<16x256xf32> to vector<16x256xbf16>
    %c0_6 = arith.constant 0 : index
    %c0_7 = arith.constant 0 : index
    %10 = vector.load %arg4[%c0_6, %c0_7] : memref<256x256xbf16, #tpu.memory_space<vmem>>, vector<256x256xbf16>
    %cst_8 = arith.constant dense<0.000000e+00> : vector<16x256xf32>
    %11 = tpu.matmul %9, %10, %cst_8 {dimension_numbers = #tpu.dot_dimension_numbers<[1], [0], [0], [1], [0, 0, 1, 1], [], []>} : vector<16x256xbf16>, vector<256x256xbf16>, vector<16x256xf32> -> vector<16x256xf32>
    %c0_9 = arith.constant 0 : index
    %c0_10 = arith.constant 0 : index
    %12 = vector.load %arg5[%c0_9, %c0_10] : memref<1x256xf32, #tpu.memory_space<vmem>>, vector<1x256xf32>
    %13 = vector.broadcast %12 : vector<1x256xf32> to vector<16x256xf32>
    %14 = arith.addf %11, %13 : vector<16x256xf32>
    %cst_11 = arith.constant 0.000000e+00 : f32
    %15 = vector.broadcast %cst_11 : f32 to vector<16x256xf32>
    %16 = arith.maximumf %14, %15 : vector<16x256xf32>
    %17 = arith.truncf %16 : vector<16x256xf32> to vector<16x256xbf16>
    %c0_12 = arith.constant 0 : index
    %c0_13 = arith.constant 0 : index
    %18 = vector.load %arg6[%c0_12, %c0_13] : memref<256x128xbf16, #tpu.memory_space<vmem>>, vector<256x128xbf16>
    %cst_14 = arith.constant dense<0.000000e+00> : vector<16x128xf32>
    %19 = tpu.matmul %17, %18, %cst_14 {dimension_numbers = #tpu.dot_dimension_numbers<[1], [0], [0], [1], [0, 0, 1, 1], [], []>} : vector<16x256xbf16>, vector<256x128xbf16>, vector<16x128xf32> -> vector<16x128xf32>
    %c0_15 = arith.constant 0 : index
    %c0_16 = arith.constant 0 : index
    %20 = vector.load %arg7[%c0_15, %c0_16] : memref<1x128xf32, #tpu.memory_space<vmem>>, vector<1x128xf32>
    %21 = vector.broadcast %20 : vector<1x128xf32> to vector<16x128xf32>
    %22 = arith.addf %19, %21 : vector<16x128xf32>
    %23 = arith.truncf %22 : vector<16x128xf32> to vector<16x128xbf16>
    %c0_17 = arith.constant 0 : index
    %c0_18 = arith.constant 0 : index
    %24 = vector.load %arg8[%c0_17, %c0_18] : memref<16x128xbf16, #tpu.memory_space<vmem>>, vector<16x128xbf16>
    tpu.vector_store %arg8[%c0_17, %c0_18], %23 {strides = array<i32>} : memref<16x128xbf16, #tpu.memory_space<vmem>>, vector<16x128xbf16>,
    return
  }
  func.func @transform_0(%arg0: i32) -> (i32, i32) {
    %c0_i32 = arith.constant 0 : i32
    %c0_i32_0 = arith.constant 0 : i32
    return %arg0, %c0_i32 : i32, i32
  }
  func.func @transform_1(%arg0: i32) -> (i32, i32) {
    %c0_i32 = arith.constant 0 : i32
    %c0_i32_0 = arith.constant 0 : i32
    %c0_i32_1 = arith.constant 0 : i32
    return %c0_i32, %c0_i32_0 : i32, i32
  }
  func.func @transform_2(%arg0: i32) -> (i32, i32) {
    %c0_i32 = arith.constant 0 : i32
    %c0_i32_0 = arith.constant 0 : i32
    %c0_i32_1 = arith.constant 0 : i32
    return %c0_i32, %c0_i32_0 : i32, i32
  }
  func.func @transform_3(%arg0: i32) -> (i32, i32) {
    %c0_i32 = arith.constant 0 : i32
    %c0_i32_0 = arith.constant 0 : i32
    %c0_i32_1 = arith.constant 0 : i32
    return %c0_i32, %c0_i32_0 : i32, i32
  }
  func.func @transform_4(%arg0: i32) -> (i32, i32) {
    %c0_i32 = arith.constant 0 : i32
    %c0_i32_0 = arith.constant 0 : i32
    %c0_i32_1 = arith.constant 0 : i32
    return %c0_i32, %c0_i32_0 : i32, i32
  }
  func.func @transform_5(%arg0: i32) -> (i32, i32) {
    %c0_i32 = arith.constant 0 : i32
    %c0_i32_0 = arith.constant 0 : i32
    %c0_i32_1 = arith.constant 0 : i32
    return %c0_i32, %c0_i32_0 : i32, i32
  }
  func.func @transform_6(%arg0: i32) -> (i32, i32) {
    %c0_i32 = arith.constant 0 : i32
    %c0_i32_0 = arith.constant 0 : i32
    %c0_i32_1 = arith.constant 0 : i32
    return %c0_i32, %c0_i32_0 : i32, i32
  }
  func.func @transform_7(%arg0: i32) -> (i32, i32) {
    %c0_i32 = arith.constant 0 : i32
    %c0_i32_0 = arith.constant 0 : i32
    return %arg0, %c0_i32 : i32, i32
  }
}

</mosaic_0001>

<llo_original>
// kernel: tpu_custom_call.1
$region0: #{tpu_custom_call.1}
  #allocation0 [shape = 'u32[]', space=smem, size = 0x4, offset = 0x4, fixed_abs, tag = 'smem constant byte address 0x4 - core index']
  #allocation1 [shape = 'u32[72,128]{1,0:T(1,128)}', space=vmem, size = 0x9000, scoped, tag = 'internal scratch']
  %s0 = inlined_call_operand.hbm [shape: f32[16,784], index: 0, kind: input, shape index: {}]
  %s1 = inlined_call_operand.hbm [shape: bf16[784,256], index: 1, kind: input, shape index: {}]
  %s2 = inlined_call_operand.hbm [shape: f32[1,256], index: 2, kind: input, shape index: {}]
  %s3 = inlined_call_operand.hbm [shape: bf16[256,256], index: 3, kind: input, shape index: {}]
  %s4 = inlined_call_operand.vmem [shape: f32[1,256], index: 4, kind: input, shape index: {}]
  %s5 = inlined_call_operand.hbm [shape: bf16[256,128], index: 5, kind: input, shape index: {}]
  %s6 = inlined_call_operand.vmem [shape: f32[1,128], index: 6, kind: input, shape index: {}]
  %s7 = inlined_call_operand.hbm [shape: bf16[16,128], index: 7, kind: output, shape index: {}]
  %s8 = sld [smem:[#allocation0]]
  $region58: #{tpu_custom_call.1} parent=0
    _
  %s10 = ssub.s32 1, %s8
  %s11 = scalar_select 0, %s10, %s8
  $region1: #{tpu_custom_call.1} parent=0
    #allocation2 [shape = 'u8[57344]{0}', space=vmem, size = 0xe000, scoped, tag = 'input window, operand 0, single buffered']
    #allocation3 [shape = 's32[1]{0}', space=sflag, size = 0x4, scoped, tag = 'scoped memory for tpu_custom_call.1']
    #allocation4 [shape = 's32[1]{0}', space=sflag, size = 0x4, scoped, tag = 'scoped memory for tpu_custom_call.1']
    #allocation5 [shape = 'u8[401408]{0}', space=vmem, size = 0x62000, scoped, tag = 'input window, operand 1, single buffered']
    #allocation6 [shape = 's32[1]{0}', space=sflag, size = 0x4, scoped, tag = 'scoped memory for tpu_custom_call.1']
    #allocation7 [shape = 'u8[1024]{0}', space=vmem, size = 0x400, scoped, tag = 'input window, operand 2, single buffered']
    #allocation8 [shape = 'u8[131072]{0}', space=vmem, size = 0x20000, scoped, tag = 'input window, operand 3, single buffered']
    #allocation9 [shape = 's32[1]{0}', space=sflag, size = 0x4, scoped, tag = 'scoped memory for tpu_custom_call.1']
    #allocation10 [shape = 'u8[65536]{0}', space=vmem, size = 0x10000, scoped, tag = 'input window, operand 5, single buffered']
    #allocation11 [shape = 'u8[4096]{0}', space=vmem, size = 0x1000, scoped, tag = 'output window, operand 0, single buffered']
    %12 = vsyncpa [#allocation3], 0
    %13 = vsyncpa [#allocation6], 0
    %14 = vsyncpa [#allocation9], 0
    %15 = vsyncpa [#allocation4], 0
    // Predicated region
    $region2: #{tpu_custom_call.1} parent=1 // pred_check
      _
    $region3: #{tpu_custom_call.1} parent=1 // pred_check_branch
      %17 = sbr.rel (0) target = $region5
    $region4: #{tpu_custom_call.1} parent=1 // pred_region
      %19 = vsyncadd [#allocation3], 0
      %s20 = sshll.u32 %s0, 4
      %s21 = int_to_ptr.hbm [resolvable:$true] %s20
      %s22 = sshll.u32 [#allocation2], 4
      %s23 = int_to_ptr.vmem [resolvable:$true] %s22
      %28 = dma.hbm_to_vmem [thread:$0]  %s21, 1792, %s23, [#allocation3], 896, 896, 56
    $region5: #{tpu_custom_call.1} parent=1 // pred_fallthru
      _
    // Predicated region
    $region6: #{tpu_custom_call.1} parent=1 // pred_check
      _
    $region7: #{tpu_custom_call.1} parent=1 // pred_check_branch
      %30 = sbr.rel (0) target = $region9
    $region8: #{tpu_custom_call.1} parent=1 // pred_region
      %32 = vsyncadd [#allocation6], 0
      %s33 = sshll.u32 %s1, 4
      %s34 = int_to_ptr.hbm [resolvable:$true] %s33
      %s35 = sshll.u32 [#allocation5], 4
      %s36 = int_to_ptr.vmem [resolvable:$true] %s35
      %41 = dma.hbm_to_vmem [thread:$0]  %s34, 12544, %s36, [#allocation6], 128, 128, 8
    $region9: #{tpu_custom_call.1} parent=1 // pred_fallthru
      _
    // Predicated region
    $region10: #{tpu_custom_call.1} parent=1 // pred_check
      _
    $region11: #{tpu_custom_call.1} parent=1 // pred_check_branch
      %43 = sbr.rel (0) target = $region13
    $region12: #{tpu_custom_call.1} parent=1 // pred_region
      %45 = vsyncadd [#allocation6], 0
      %s47 = sshll.u32 %s2, 4
      %s48 = int_to_ptr.hbm [resolvable:$true] %s47
      %s49 = sshll.u32 [#allocation7], 4
      %s50 = int_to_ptr.vmem [resolvable:$true] %s49
      %52 = dma.hbm_to_vmem [thread:$0]  %s48, 32, %s50, [#allocation6]
    $region13: #{tpu_custom_call.1} parent=1 // pred_fallthru
      _
    // Predicated region
    $region14: #{tpu_custom_call.1} parent=1 // pred_check
      _
    $region15: #{tpu_custom_call.1} parent=1 // pred_check_branch
      %54 = sbr.rel (0) target = $region17
    $region16: #{tpu_custom_call.1} parent=1 // pred_region
      %56 = vsyncadd [#allocation9], 0
      %s57 = sshll.u32 %s3, 4
      %s58 = int_to_ptr.hbm [resolvable:$true] %s57
      %s59 = sshll.u32 [#allocation8], 4
      %s60 = int_to_ptr.vmem [resolvable:$true] %s59
      %65 = dma.hbm_to_vmem [thread:$0]  %s58, 4096, %s60, [#allocation9], 128, 128, 8
    $region17: #{tpu_custom_call.1} parent=1 // pred_fallthru
      _
    // Predicated region
    $region18: #{tpu_custom_call.1} parent=1 // pred_check
      _
    $region19: #{tpu_custom_call.1} parent=1 // pred_check_branch
      %67 = sbr.rel (0) target = $region21
    $region20: #{tpu_custom_call.1} parent=1 // pred_region
      _
    $region21: #{tpu_custom_call.1} parent=1 // pred_fallthru
      _
    // Predicated region
    $region22: #{tpu_custom_call.1} parent=1 // pred_check
      _
    $region23: #{tpu_custom_call.1} parent=1 // pred_check_branch
      %69 = sbr.rel (0) target = $region25
    $region24: #{tpu_custom_call.1} parent=1 // pred_region
      %71 = vsyncadd [#allocation9], 0
      %s72 = sshll.u32 %s5, 4
      %s73 = int_to_ptr.hbm [resolvable:$true] %s72
      %s74 = sshll.u32 [#allocation10], 4
      %s75 = int_to_ptr.vmem [resolvable:$true] %s74
      %80 = dma.hbm_to_vmem [thread:$0]  %s73, 2048, %s75, [#allocation9], 64, 64, 4
    $region25: #{tpu_custom_call.1} parent=1 // pred_fallthru
      _
    // Predicated region
    $region26: #{tpu_custom_call.1} parent=1 // pred_check
      _
    $region27: #{tpu_custom_call.1} parent=1 // pred_check_branch
      %82 = sbr.rel (0) target = $region29
    $region28: #{tpu_custom_call.1} parent=1 // pred_region
      _
    $region29: #{tpu_custom_call.1} parent=1 // pred_fallthru
      _
    // Predicated region
    $region30: #{tpu_custom_call.1} parent=1 // pred_check
      _
    $region31: #{tpu_custom_call.1} parent=1 // pred_check_branch
      %84 = sbr.rel (0) target = $region33
    $region32: #{tpu_custom_call.1} parent=1 // pred_region
      %86 = dma.done [#allocation3], 1792
    $region33: #{tpu_custom_call.1} parent=1 // pred_fallthru
      _
    // Predicated region
    $region34: #{tpu_custom_call.1} parent=1 // pred_check
      _
    $region35: #{tpu_custom_call.1} parent=1 // pred_check_branch
      %88 = sbr.rel (0) target = $region37
    $region36: #{tpu_custom_call.1} parent=1 // pred_region
      %90 = dma.done [#allocation6], 12544
    $region37: #{tpu_custom_call.1} parent=1 // pred_fallthru
      _
    // Predicated region
    $region38: #{tpu_custom_call.1} parent=1 // pred_check
      _
    $region39: #{tpu_custom_call.1} parent=1 // pred_check_branch
      %92 = sbr.rel (0) target = $region41
    $region40: #{tpu_custom_call.1} parent=1 // pred_region
      %94 = dma.done [#allocation6], 32
    $region41: #{tpu_custom_call.1} parent=1 // pred_fallthru
      _
    // Predicated region
    $region42: #{tpu_custom_call.1} parent=1 // pred_check
      _
    $region43: #{tpu_custom_call.1} parent=1 // pred_check_branch
      %96 = sbr.rel (0) target = $region45
    $region44: #{tpu_custom_call.1} parent=1 // pred_region
      %98 = dma.done [#allocation9], 4096
    $region45: #{tpu_custom_call.1} parent=1 // pred_fallthru
      _
    // Predicated region
    $region46: #{tpu_custom_call.1} parent=1 // pred_check
      _
    $region47: #{tpu_custom_call.1} parent=1 // pred_check_branch
      %100 = sbr.rel (0) target = $region49
    $region48: #{tpu_custom_call.1} parent=1 // pred_region
      %102 = dma.done [#allocation9], 2048
    $region49: #{tpu_custom_call.1} parent=1 // pred_fallthru
      _
    %v104 = vld [vmem:[#allocation2] sm:$0xff]
    %v105 = vld [vmem:[#allocation2 + $0x8] sm:$0xff]
    %v106 = vld [vmem:[#allocation2 + $0x10] sm:$0xff]
    %v107 = vld [vmem:[#allocation2 + $0x18] sm:$0xff]
    %v108 = vld [vmem:[#allocation2 + $0x20] sm:$0xff]
    %v109 = vld [vmem:[#allocation2 + $0x28] sm:$0xff]
    %v110 = vld [vmem:[#allocation2 + $0x30] sm:$0xff]
    %v111 = vld [vmem:[#allocation2 + $0x38] sm:$0xff]
    %v112 = vld [vmem:[#allocation2 + $0x40] sm:$0xff]
    %v113 = vld [vmem:[#allocation2 + $0x48] sm:$0xff]
    %v114 = vld [vmem:[#allocation2 + $0x50] sm:$0xff]
    %v115 = vld [vmem:[#allocation2 + $0x58] sm:$0xff]
    %v116 = vld [vmem:[#allocation2 + $0x60] sm:$0xff]
    %v117 = vld [vmem:[#allocation2 + $0x68] sm:$0xff]
    %v118 = vpack.c.bf16 %v111, %v104
    %v119 = vpack.c.bf16 %v112, %v105
    %v120 = vpack.c.bf16 %v113, %v106
    %v121 = vpack.c.bf16 %v114, %v107
    %v122 = vpack.c.bf16 %v115, %v108
    %v123 = vpack.c.bf16 %v116, %v109
    %v124 = vpack.c.bf16 %v117, %v110
    %v125 = vld [vmem:[#allocation5] sm:$0xff]
    %v126 = vld [vmem:[#allocation5 + $0x8] sm:$0xff]
    %v127 = vld [vmem:[#allocation5 + $0x10] sm:$0xff]
    %v128 = vld [vmem:[#allocation5 + $0x18] sm:$0xff]
    %v129 = vld [vmem:[#allocation5 + $0x20] sm:$0xff]
    %v130 = vld [vmem:[#allocation5 + $0x28] sm:$0xff]
    %v131 = vld [vmem:[#allocation5 + $0x30] sm:$0xff]
    %v132 = vld [vmem:[#allocation5 + $0x38] sm:$0xff]
    %v133 = vld [vmem:[#allocation5 + $0x40] sm:$0xff]
    %v134 = vld [vmem:[#allocation5 + $0x48] sm:$0xff]
    %v135 = vld [vmem:[#allocation5 + $0x50] sm:$0xff]
    %v136 = vld [vmem:[#allocation5 + $0x58] sm:$0xff]
    %v137 = vld [vmem:[#allocation5 + $0x60] sm:$0xff]
    %v138 = vld [vmem:[#allocation5 + $0x68] sm:$0xff]
    %v139 = vld [vmem:[#allocation5 + $0x70] sm:$0xff]
    %v140 = vld [vmem:[#allocation5 + $0x78] sm:$0xff]
    %v141 = vld [vmem:[#allocation5 + $0x80] sm:$0xff]
    %v142 = vld [vmem:[#allocation5 + $0x88] sm:$0xff]
    %v143 = vld [vmem:[#allocation5 + $0x90] sm:$0xff]
    %v144 = vld [vmem:[#allocation5 + $0x98] sm:$0xff]
    %v145 = vld [vmem:[#allocation5 + $0xa0] sm:$0xff]
    %v146 = vld [vmem:[#allocation5 + $0xa8] sm:$0xff]
    %v147 = vld [vmem:[#allocation5 + $0xb0] sm:$0xff]
    %v148 = vld [vmem:[#allocation5 + $0xb8] sm:$0xff]
    %v149 = vld [vmem:[#allocation5 + $0xc0] sm:$0xff]
    %v150 = vld [vmem:[#allocation5 + $0xc8] sm:$0xff]
    %v151 = vld [vmem:[#allocation5 + $0xd0] sm:$0xff]
    %v152 = vld [vmem:[#allocation5 + $0xd8] sm:$0xff]
    %v153 = vld [vmem:[#allocation5 + $0xe0] sm:$0xff]
    %v154 = vld [vmem:[#allocation5 + $0xe8] sm:$0xff]
    %v155 = vld [vmem:[#allocation5 + $0xf0] sm:$0xff]
    %v156 = vld [vmem:[#allocation5 + $0xf8] sm:$0xff]
    %v157 = vld [vmem:[#allocation5 + $0x100] sm:$0xff]
    %v158 = vld [vmem:[#allocation5 + $0x108] sm:$0xff]
    %v159 = vld [vmem:[#allocation5 + $0x110] sm:$0xff]
    %v160 = vld [vmem:[#allocation5 + $0x118] sm:$0xff]
    %v161 = vld [vmem:[#allocation5 + $0x120] sm:$0xff]
    %v162 = vld [vmem:[#allocation5 + $0x128] sm:$0xff]
    %v163 = vld [vmem:[#allocation5 + $0x130] sm:$0xff]
    %v164 = vld [vmem:[#allocation5 + $0x138] sm:$0xff]
    %v165 = vld [vmem:[#allocation5 + $0x140] sm:$0xff]
    %v166 = vld [vmem:[#allocation5 + $0x148] sm:$0xff]
    %v167 = vld [vmem:[#allocation5 + $0x150] sm:$0xff]
    %v168 = vld [vmem:[#allocation5 + $0x158] sm:$0xff]
    %v169 = vld [vmem:[#allocation5 + $0x160] sm:$0xff]
    %v170 = vld [vmem:[#allocation5 + $0x168] sm:$0xff]
    %v171 = vld [vmem:[#allocation5 + $0x170] sm:$0xff]
    %v172 = vld [vmem:[#allocation5 + $0x178] sm:$0xff]
    %v173 = vld [vmem:[#allocation5 + $0x180] sm:$0xff]
    %v174 = vld [vmem:[#allocation5 + $0x188] sm:$0xff]
    %v175 = vld [vmem:[#allocation5 + $0x190] sm:$0xff]
    %v176 = vld [vmem:[#allocation5 + $0x198] sm:$0xff]
    %v177 = vld [vmem:[#allocation5 + $0x1a0] sm:$0xff]
    %v178 = vld [vmem:[#allocation5 + $0x1a8] sm:$0xff]
    %v179 = vld [vmem:[#allocation5 + $0x1b0] sm:$0xff]
    %v180 = vld [vmem:[#allocation5 + $0x1b8] sm:$0xff]
    %v181 = vld [vmem:[#allocation5 + $0x1c0] sm:$0xff]
    %v182 = vld [vmem:[#allocation5 + $0x1c8] sm:$0xff]
    %v183 = vld [vmem:[#allocation5 + $0x1d0] sm:$0xff]
    %v184 = vld [vmem:[#allocation5 + $0x1d8] sm:$0xff]
    %v185 = vld [vmem:[#allocation5 + $0x1e0] sm:$0xff]
    %v186 = vld [vmem:[#allocation5 + $0x1e8] sm:$0xff]
    %v187 = vld [vmem:[#allocation5 + $0x1f0] sm:$0xff]
    %v188 = vld [vmem:[#allocation5 + $0x1f8] sm:$0xff]
    %v189 = vld [vmem:[#allocation5 + $0x200] sm:$0xff]
    %v190 = vld [vmem:[#allocation5 + $0x208] sm:$0xff]
    %v191 = vld [vmem:[#allocation5 + $0x210] sm:$0xff]
    %v192 = vld [vmem:[#allocation5 + $0x218] sm:$0xff]
    %v193 = vld [vmem:[#allocation5 + $0x220] sm:$0xff]
    %v194 = vld [vmem:[#allocation5 + $0x228] sm:$0xff]
    %v195 = vld [vmem:[#allocation5 + $0x230] sm:$0xff]
    %v196 = vld [vmem:[#allocation5 + $0x238] sm:$0xff]
    %v197 = vld [vmem:[#allocation5 + $0x240] sm:$0xff]
    %v198 = vld [vmem:[#allocation5 + $0x248] sm:$0xff]
    %v199 = vld [vmem:[#allocation5 + $0x250] sm:$0xff]
    %v200 = vld [vmem:[#allocation5 + $0x258] sm:$0xff]
    %v201 = vld [vmem:[#allocation5 + $0x260] sm:$0xff]
    %v202 = vld [vmem:[#allocation5 + $0x268] sm:$0xff]
    %v203 = vld [vmem:[#allocation5 + $0x270] sm:$0xff]
    %v204 = vld [vmem:[#allocation5 + $0x278] sm:$0xff]
    %v205 = vld [vmem:[#allocation5 + $0x280] sm:$0xff]
    %v206 = vld [vmem:[#allocation5 + $0x288] sm:$0xff]
    %v207 = vld [vmem:[#allocation5 + $0x290] sm:$0xff]
    %v208 = vld [vmem:[#allocation5 + $0x298] sm:$0xff]
    %v209 = vld [vmem:[#allocation5 + $0x2a0] sm:$0xff]
    %v210 = vld [vmem:[#allocation5 + $0x2a8] sm:$0xff]
    %v211 = vld [vmem:[#allocation5 + $0x2b0] sm:$0xff]
    %v212 = vld [vmem:[#allocation5 + $0x2b8] sm:$0xff]
    %v213 = vld [vmem:[#allocation5 + $0x2c0] sm:$0xff]
    %v214 = vld [vmem:[#allocation5 + $0x2c8] sm:$0xff]
    %v215 = vld [vmem:[#allocation5 + $0x2d0] sm:$0xff]
    %v216 = vld [vmem:[#allocation5 + $0x2d8] sm:$0xff]
    %v217 = vld [vmem:[#allocation5 + $0x2e0] sm:$0xff]
    %v218 = vld [vmem:[#allocation5 + $0x2e8] sm:$0xff]
    %v219 = vld [vmem:[#allocation5 + $0x2f0] sm:$0xff]
    %v220 = vld [vmem:[#allocation5 + $0x2f8] sm:$0xff]
    %v221 = vld [vmem:[#allocation5 + $0x300] sm:$0xff]
    %v222 = vld [vmem:[#allocation5 + $0x308] sm:$0xff]
    %v223 = vld [vmem:[#allocation7] sm:$0x3]
    %v225 = vperm.slane %v223, 0
    %v226 = vperm.slane %v223, 1
    %v327 = vunpack.c.l.b16 %v125
    %v328 = vunpack.c.h.b16 %v125
    %v329 = vunpack.c.l.b16 %v126
    %v330 = vunpack.c.h.b16 %v126
    %v331 = vunpack.c.l.b16 %v127
    %v332 = vunpack.c.h.b16 %v127
    %v333 = vunpack.c.l.b16 %v128
    %v334 = vunpack.c.h.b16 %v128
    %v335 = vunpack.c.l.b16 %v129
    %v336 = vunpack.c.h.b16 %v129
    %v337 = vunpack.c.l.b16 %v130
    %v338 = vunpack.c.h.b16 %v130
    %v339 = vunpack.c.l.b16 %v131
    %v340 = vunpack.c.h.b16 %v131
    %v341 = vunpack.c.l.b16 %v132
    %v342 = vunpack.c.h.b16 %v132
    %v343 = vunpack.c.l.b16 %v133
    %v344 = vunpack.c.h.b16 %v133
    %v345 = vunpack.c.l.b16 %v134
    %v346 = vunpack.c.h.b16 %v134
    %v347 = vunpack.c.l.b16 %v135
    %v348 = vunpack.c.h.b16 %v135
    %v349 = vunpack.c.l.b16 %v136
    %v350 = vunpack.c.h.b16 %v136
    %v351 = vunpack.c.l.b16 %v137
    %v352 = vunpack.c.h.b16 %v137
    %v353 = vunpack.c.l.b16 %v138
    %v354 = vunpack.c.h.b16 %v138
    %v355 = vunpack.c.l.b16 %v139
    %v356 = vunpack.c.h.b16 %v139
    %v357 = vunpack.c.l.b16 %v140
    %v358 = vunpack.c.h.b16 %v140
    %v359 = vunpack.c.l.b16 %v141
    %v360 = vunpack.c.h.b16 %v141
    %v361 = vunpack.c.l.b16 %v142
    %v362 = vunpack.c.h.b16 %v142
    %v363 = vunpack.c.l.b16 %v143
    %v364 = vunpack.c.h.b16 %v143
    %v365 = vunpack.c.l.b16 %v144
    %v366 = vunpack.c.h.b16 %v144
    %v367 = vunpack.c.l.b16 %v145
    %v368 = vunpack.c.h.b16 %v145
    %v369 = vunpack.c.l.b16 %v146
    %v370 = vunpack.c.h.b16 %v146
    %v371 = vunpack.c.l.b16 %v147
    %v372 = vunpack.c.h.b16 %v147
    %v373 = vunpack.c.l.b16 %v148
    %v374 = vunpack.c.h.b16 %v148
    %v375 = vunpack.c.l.b16 %v149
    %v376 = vunpack.c.h.b16 %v149
    %v377 = vunpack.c.l.b16 %v150
    %v378 = vunpack.c.h.b16 %v150
    %v379 = vunpack.c.l.b16 %v151
    %v380 = vunpack.c.h.b16 %v151
    %v381 = vunpack.c.l.b16 %v152
    %v382 = vunpack.c.h.b16 %v152
    %v383 = vunpack.c.l.b16 %v153
    %v384 = vunpack.c.h.b16 %v153
    %v385 = vunpack.c.l.b16 %v154
    %v386 = vunpack.c.h.b16 %v154
    %v387 = vunpack.c.l.b16 %v155
    %v388 = vunpack.c.h.b16 %v155
    %v389 = vunpack.c.l.b16 %v156
    %v390 = vunpack.c.h.b16 %v156
    %v391 = vunpack.c.l.b16 %v157
    %v392 = vunpack.c.h.b16 %v157
    %v393 = vunpack.c.l.b16 %v158
    %v394 = vunpack.c.h.b16 %v158
    %v395 = vunpack.c.l.b16 %v159
    %v396 = vunpack.c.h.b16 %v159
    %v397 = vunpack.c.l.b16 %v160
    %v398 = vunpack.c.h.b16 %v160
    %v399 = vunpack.c.l.b16 %v161
    %v400 = vunpack.c.h.b16 %v161
    %v401 = vunpack.c.l.b16 %v162
    %v402 = vunpack.c.h.b16 %v162
    %v403 = vunpack.c.l.b16 %v163
    %v404 = vunpack.c.h.b16 %v163
    %v405 = vunpack.c.l.b16 %v164
    %v406 = vunpack.c.h.b16 %v164
    %v407 = vunpack.c.l.b16 %v165
    %v408 = vunpack.c.h.b16 %v165
    %v409 = vunpack.c.l.b16 %v166
    %v410 = vunpack.c.h.b16 %v166
    %v411 = vunpack.c.l.b16 %v167
    %v412 = vunpack.c.h.b16 %v167
    %v413 = vunpack.c.l.b16 %v168
    %v414 = vunpack.c.h.b16 %v168
    %v415 = vunpack.c.l.b16 %v169
    %v416 = vunpack.c.h.b16 %v169
    %v417 = vunpack.c.l.b16 %v170
    %v418 = vunpack.c.h.b16 %v170
    %v419 = vunpack.c.l.b16 %v171
    %v420 = vunpack.c.h.b16 %v171
    %v421 = vunpack.c.l.b16 %v172
    %v422 = vunpack.c.h.b16 %v172
    %v423 = vunpack.c.l.b16 %v173
    %v424 = vunpack.c.h.b16 %v173
    %v425 = vunpack.c.l.b16 %v174
    %v426 = vunpack.c.h.b16 %v174
    %v427 = vunpack.c.l.b16 %v175
    %v428 = vunpack.c.h.b16 %v175
    %v429 = vunpack.c.l.b16 %v176
    %v430 = vunpack.c.h.b16 %v176
    %v431 = vunpack.c.l.b16 %v177
    %v432 = vunpack.c.h.b16 %v177
    %v433 = vunpack.c.l.b16 %v178
    %v434 = vunpack.c.h.b16 %v178
    %v435 = vunpack.c.l.b16 %v179
    %v436 = vunpack.c.h.b16 %v179
    %v437 = vunpack.c.l.b16 %v180
    %v438 = vunpack.c.h.b16 %v180
    %v439 = vunpack.c.l.b16 %v181
    %v440 = vunpack.c.h.b16 %v181
    %v441 = vunpack.c.l.b16 %v182
    %v442 = vunpack.c.h.b16 %v182
    %v443 = vunpack.c.l.b16 %v183
    %v444 = vunpack.c.h.b16 %v183
    %v445 = vunpack.c.l.b16 %v184
    %v446 = vunpack.c.h.b16 %v184
    %v447 = vunpack.c.l.b16 %v185
    %v448 = vunpack.c.h.b16 %v185
    %v449 = vunpack.c.l.b16 %v186
    %v450 = vunpack.c.h.b16 %v186
    %v451 = vunpack.c.l.b16 %v187
    %v452 = vunpack.c.h.b16 %v187
    %v453 = vunpack.c.l.b16 %v188
    %v454 = vunpack.c.h.b16 %v188
    %v455 = vunpack.c.l.b16 %v189
    %v456 = vunpack.c.h.b16 %v189
    %v457 = vunpack.c.l.b16 %v190
    %v458 = vunpack.c.h.b16 %v190
    %v459 = vunpack.c.l.b16 %v191
    %v460 = vunpack.c.h.b16 %v191
    %v461 = vunpack.c.l.b16 %v192
    %v462 = vunpack.c.h.b16 %v192
    %v463 = vunpack.c.l.b16 %v193
    %v464 = vunpack.c.h.b16 %v193
    %v465 = vunpack.c.l.b16 %v194
    %v466 = vunpack.c.h.b16 %v194
    %v467 = vunpack.c.l.b16 %v195
    %v468 = vunpack.c.h.b16 %v195
    %v469 = vunpack.c.l.b16 %v196
    %v470 = vunpack.c.h.b16 %v196
    %v471 = vunpack.c.l.b16 %v197
    %v472 = vunpack.c.h.b16 %v197
    %v473 = vunpack.c.l.b16 %v198
    %v474 = vunpack.c.h.b16 %v198
    %v475 = vunpack.c.l.b16 %v199
    %v476 = vunpack.c.h.b16 %v199
    %v477 = vunpack.c.l.b16 %v200
    %v478 = vunpack.c.h.b16 %v200
    %v479 = vunpack.c.l.b16 %v201
    %v480 = vunpack.c.h.b16 %v201
    %v481 = vunpack.c.l.b16 %v202
    %v482 = vunpack.c.h.b16 %v202
    %v483 = vunpack.c.l.b16 %v203
    %v484 = vunpack.c.h.b16 %v203
    %v485 = vunpack.c.l.b16 %v204
    %v486 = vunpack.c.h.b16 %v204
    %v487 = vunpack.c.l.b16 %v205
    %v488 = vunpack.c.h.b16 %v205
    %v489 = vunpack.c.l.b16 %v206
    %v490 = vunpack.c.h.b16 %v206
    %v491 = vunpack.c.l.b16 %v207
    %v492 = vunpack.c.h.b16 %v207
    %v493 = vunpack.c.l.b16 %v208
    %v494 = vunpack.c.h.b16 %v208
    %v495 = vunpack.c.l.b16 %v209
    %v496 = vunpack.c.h.b16 %v209
    %v497 = vunpack.c.l.b16 %v210
    %v498 = vunpack.c.h.b16 %v210
    %v499 = vunpack.c.l.b16 %v211
    %v500 = vunpack.c.h.b16 %v211
    %v501 = vunpack.c.l.b16 %v212
    %v502 = vunpack.c.h.b16 %v212
    %v503 = vunpack.c.l.b16 %v213
    %v504 = vunpack.c.h.b16 %v213
    %v505 = vunpack.c.l.b16 %v214
    %v506 = vunpack.c.h.b16 %v214
    %v507 = vunpack.c.l.b16 %v215
    %v508 = vunpack.c.h.b16 %v215
    %v509 = vunpack.c.l.b16 %v216
    %v510 = vunpack.c.h.b16 %v216
    %v511 = vunpack.c.l.b16 %v217
    %v512 = vunpack.c.h.b16 %v217
    %v513 = vunpack.c.l.b16 %v218
    %v514 = vunpack.c.h.b16 %v218
    %v515 = vunpack.c.l.b16 %v219
    %v516 = vunpack.c.h.b16 %v219
    %v517 = vunpack.c.l.b16 %v220
    %v518 = vunpack.c.h.b16 %v220
    %v519 = vunpack.c.l.b16 %v221
    %v520 = vunpack.c.h.b16 %v221
    %v521 = vunpack.c.l.b16 %v222
    %v522 = vunpack.c.h.b16 %v222
    %v523 = vpack.c.b16 %v329, %v327
    %v524 = vpack.c.b16 %v330, %v328
    %v525 = vpack.c.b16 %v333, %v331
    %v526 = vpack.c.b16 %v334, %v332
    %v527 = vpack.c.b16 %v337, %v335
    %v528 = vpack.c.b16 %v338, %v336
    %v529 = vpack.c.b16 %v341, %v339
    %v530 = vpack.c.b16 %v342, %v340
    %v531 = vpack.c.b16 %v345, %v343
    %v532 = vpack.c.b16 %v346, %v344
    %v533 = vpack.c.b16 %v349, %v347
    %v534 = vpack.c.b16 %v350, %v348
    %v535 = vpack.c.b16 %v353, %v351
    %v536 = vpack.c.b16 %v354, %v352
    %v537 = vpack.c.b16 %v357, %v355
    %v538 = vpack.c.b16 %v358, %v356
    %v539 = vpack.c.b16 %v361, %v359
    %v540 = vpack.c.b16 %v362, %v360
    %v541 = vpack.c.b16 %v365, %v363
    %v542 = vpack.c.b16 %v366, %v364
    %v543 = vpack.c.b16 %v369, %v367
    %v544 = vpack.c.b16 %v370, %v368
    %v545 = vpack.c.b16 %v373, %v371
    %v546 = vpack.c.b16 %v374, %v372
    %v547 = vpack.c.b16 %v377, %v375
    %v548 = vpack.c.b16 %v378, %v376
    %v549 = vpack.c.b16 %v381, %v379
    %v550 = vpack.c.b16 %v382, %v380
    %v551 = vpack.c.b16 %v385, %v383
    %v552 = vpack.c.b16 %v386, %v384
    %v553 = vpack.c.b16 %v389, %v387
    %v554 = vpack.c.b16 %v390, %v388
    %v555 = vpack.c.b16 %v393, %v391
    %v556 = vpack.c.b16 %v394, %v392
    %v557 = vpack.c.b16 %v397, %v395
    %v558 = vpack.c.b16 %v398, %v396
    %v559 = vpack.c.b16 %v401, %v399
    %v560 = vpack.c.b16 %v402, %v400
    %v561 = vpack.c.b16 %v405, %v403
    %v562 = vpack.c.b16 %v406, %v404
    %v563 = vpack.c.b16 %v409, %v407
    %v564 = vpack.c.b16 %v410, %v408
    %v565 = vpack.c.b16 %v413, %v411
    %v566 = vpack.c.b16 %v414, %v412
    %v567 = vpack.c.b16 %v417, %v415
    %v568 = vpack.c.b16 %v418, %v416
    %v569 = vpack.c.b16 %v421, %v419
    %v570 = vpack.c.b16 %v422, %v420
    %v571 = vpack.c.b16 %v425, %v423
    %v572 = vpack.c.b16 %v426, %v424
    %v573 = vpack.c.b16 %v429, %v427
    %v574 = vpack.c.b16 %v430, %v428
    %v575 = vpack.c.b16 %v433, %v431
    %v576 = vpack.c.b16 %v434, %v432
    %v577 = vpack.c.b16 %v437, %v435
    %v578 = vpack.c.b16 %v438, %v436
    %v579 = vpack.c.b16 %v441, %v439
    %v580 = vpack.c.b16 %v442, %v440
    %v581 = vpack.c.b16 %v445, %v443
    %v582 = vpack.c.b16 %v446, %v444
    %v583 = vpack.c.b16 %v449, %v447
    %v584 = vpack.c.b16 %v450, %v448
    %v585 = vpack.c.b16 %v453, %v451
    %v586 = vpack.c.b16 %v454, %v452
    %v587 = vpack.c.b16 %v457, %v455
    %v588 = vpack.c.b16 %v458, %v456
    %v589 = vpack.c.b16 %v461, %v459
    %v590 = vpack.c.b16 %v462, %v460
    %v591 = vpack.c.b16 %v465, %v463
    %v592 = vpack.c.b16 %v466, %v464
    %v593 = vpack.c.b16 %v469, %v467
    %v594 = vpack.c.b16 %v470, %v468
    %v595 = vpack.c.b16 %v473, %v471
    %v596 = vpack.c.b16 %v474, %v472
    %v597 = vpack.c.b16 %v477, %v475
    %v598 = vpack.c.b16 %v478, %v476
    %v599 = vpack.c.b16 %v481, %v479
    %v600 = vpack.c.b16 %v482, %v480
    %v601 = vpack.c.b16 %v485, %v483
    %v602 = vpack.c.b16 %v486, %v484
    %v603 = vpack.c.b16 %v489, %v487
    %v604 = vpack.c.b16 %v490, %v488
    %v605 = vpack.c.b16 %v493, %v491
    %v606 = vpack.c.b16 %v494, %v492
    %v607 = vpack.c.b16 %v497, %v495
    %v608 = vpack.c.b16 %v498, %v496
    %v609 = vpack.c.b16 %v501, %v499
    %v610 = vpack.c.b16 %v502, %v500
    %v611 = vpack.c.b16 %v505, %v503
    %v612 = vpack.c.b16 %v506, %v504
    %v613 = vpack.c.b16 %v509, %v507
    %v614 = vpack.c.b16 %v510, %v508
    %v615 = vpack.c.b16 %v513, %v511
    %v616 = vpack.c.b16 %v514, %v512
    %v617 = vpack.c.b16 %v517, %v515
    %v618 = vpack.c.b16 %v518, %v516
    %v619 = vpack.c.b16 %v521, %v519
    %v620 = vpack.c.b16 %v522, %v520
    %vm719 = vcmask 130048
    %v721 = vsel %vm719, %v124, 0
    %723 = vmatpush.bf16.msra.mxu0 %v537
    %724 = vmatpush.bf16.msra.mxu0 %v535
    %725 = vmatpush.bf16.msra.mxu0 %v533
    %726 = vmatpush.bf16.msra.mxu0 %v531
    %727 = vmatpush.bf16.msra.mxu0 %v529
    %728 = vmatpush.bf16.msra.mxu0 %v527
    %729 = vmatpush.bf16.msra.mxu0 %v525
    %730 = vmatpush.bf16.msra.mxu0 %v523
    %731 = vmatmul.bf16.gmra.mxu0 %v118
    %v732 = vpop.f32.mrf.mxu0
    %v733 = vadd.f32 %v225, %v732
    %v734 = vpop.f32.mrf.mxu0
    %v735 = vadd.f32 %v225, %v734
    %736 = vdwg.mxu0
    %737 = vmatpush.bf16.msra.mxu0 %v553
    %738 = vmatpush.bf16.msra.mxu0 %v551
    %739 = vmatpush.bf16.msra.mxu0 %v549
    %740 = vmatpush.bf16.msra.mxu0 %v547
    %741 = vmatpush.bf16.msra.mxu0 %v545
    %742 = vmatpush.bf16.msra.mxu0 %v543
    %743 = vmatpush.bf16.msra.mxu0 %v541
    %744 = vmatpush.bf16.msra.mxu0 %v539
    %745 = vmatmul.bf16.gmra.mxu0 %v119
    %v746 = vpop.f32.mrf.mxu0
    %v747 = vadd.f32 %v733, %v746
    %v748 = vpop.f32.mrf.mxu0
    %v749 = vadd.f32 %v735, %v748
    %750 = vdwg.mxu0
    %751 = vmatpush.bf16.msra.mxu0 %v569
    %752 = vmatpush.bf16.msra.mxu0 %v567
    %753 = vmatpush.bf16.msra.mxu0 %v565
    %754 = vmatpush.bf16.msra.mxu0 %v563
    %755 = vmatpush.bf16.msra.mxu0 %v561
    %756 = vmatpush.bf16.msra.mxu0 %v559
    %757 = vmatpush.bf16.msra.mxu0 %v557
    %758 = vmatpush.bf16.msra.mxu0 %v555
    %759 = vmatmul.bf16.gmra.mxu0 %v120
    %v760 = vpop.f32.mrf.mxu0
    %v761 = vadd.f32 %v747, %v760
    %v762 = vpop.f32.mrf.mxu0
    %v763 = vadd.f32 %v749, %v762
    %764 = vdwg.mxu0
    %765 = vmatpush.bf16.msra.mxu0 %v585
    %766 = vmatpush.bf16.msra.mxu0 %v583
    %767 = vmatpush.bf16.msra.mxu0 %v581
    %768 = vmatpush.bf16.msra.mxu0 %v579
    %769 = vmatpush.bf16.msra.mxu0 %v577
    %770 = vmatpush.bf16.msra.mxu0 %v575
    %771 = vmatpush.bf16.msra.mxu0 %v573
    %772 = vmatpush.bf16.msra.mxu0 %v571
    %773 = vmatmul.bf16.gmra.mxu0 %v121
    %v774 = vpop.f32.mrf.mxu0
    %v775 = vadd.f32 %v761, %v774
    %v776 = vpop.f32.mrf.mxu0
    %v777 = vadd.f32 %v763, %v776
    %778 = vdwg.mxu0
    %779 = vmatpush.bf16.msra.mxu0 %v601
    %780 = vmatpush.bf16.msra.mxu0 %v599
    %781 = vmatpush.bf16.msra.mxu0 %v597
    %782 = vmatpush.bf16.msra.mxu0 %v595
    %783 = vmatpush.bf16.msra.mxu0 %v593
    %784 = vmatpush.bf16.msra.mxu0 %v591
    %785 = vmatpush.bf16.msra.mxu0 %v589
    %786 = vmatpush.bf16.msra.mxu0 %v587
    %787 = vmatmul.bf16.gmra.mxu0 %v122
    %v788 = vpop.f32.mrf.mxu0
    %v789 = vadd.f32 %v775, %v788
    %v790 = vpop.f32.mrf.mxu0
    %v791 = vadd.f32 %v777, %v790
    %792 = vdwg.mxu0
    %793 = vmatpush.bf16.msra.mxu0 %v617
    %794 = vmatpush.bf16.msra.mxu0 %v615
    %795 = vmatpush.bf16.msra.mxu0 %v613
    %796 = vmatpush.bf16.msra.mxu0 %v611
    %797 = vmatpush.bf16.msra.mxu0 %v609
    %798 = vmatpush.bf16.msra.mxu0 %v607
    %799 = vmatpush.bf16.msra.mxu0 %v605
    %800 = vmatpush.bf16.msra.mxu0 %v603
    %801 = vmatmul.bf16.gmra.mxu0 %v123
    %v802 = vpop.f32.mrf.mxu0
    %v803 = vadd.f32 %v789, %v802
    %v804 = vpop.f32.mrf.mxu0
    %v805 = vadd.f32 %v791, %v804
    %806 = vdwg.mxu0
    %807 = vmatpush.bf16.msra.mxu0 0
    %808 = vmatpush.bf16.msra.mxu0 0
    %809 = vmatpush.bf16.msra.mxu0 0
    %810 = vmatpush.bf16.msra.mxu0 0
    %811 = vmatpush.bf16.msra.mxu0 0
    %812 = vmatpush.bf16.msra.mxu0 0
    %813 = vmatpush.bf16.msra.mxu0 0
    %814 = vmatpush.bf16.msra.mxu0 %v619
    %815 = vmatmul.bf16.gmra.mxu0 %v721
    %v816 = vpop.f32.mrf.mxu0
    %v817 = vadd.f32 %v803, %v816
    %v818 = vpop.f32.mrf.mxu0
    %v819 = vadd.f32 %v805, %v818
    %820 = vdwg.mxu0
    %821 = vmatpush.bf16.msra.mxu0 %v538
    %822 = vmatpush.bf16.msra.mxu0 %v536
    %823 = vmatpush.bf16.msra.mxu0 %v534
    %824 = vmatpush.bf16.msra.mxu0 %v532
    %825 = vmatpush.bf16.msra.mxu0 %v530
    %826 = vmatpush.bf16.msra.mxu0 %v528
    %827 = vmatpush.bf16.msra.mxu0 %v526
    %828 = vmatpush.bf16.msra.mxu0 %v524
    %829 = vmatmul.bf16.gmra.mxu0 %v118
    %v830 = vpop.f32.mrf.mxu0
    %v831 = vadd.f32 %v226, %v830
    %v832 = vpop.f32.mrf.mxu0
    %v833 = vadd.f32 %v226, %v832
    %834 = vdwg.mxu0
    %835 = vmatpush.bf16.msra.mxu0 %v554
    %836 = vmatpush.bf16.msra.mxu0 %v552
    %837 = vmatpush.bf16.msra.mxu0 %v550
    %838 = vmatpush.bf16.msra.mxu0 %v548
    %839 = vmatpush.bf16.msra.mxu0 %v546
    %840 = vmatpush.bf16.msra.mxu0 %v544
    %841 = vmatpush.bf16.msra.mxu0 %v542
    %842 = vmatpush.bf16.msra.mxu0 %v540
    %843 = vmatmul.bf16.gmra.mxu0 %v119
    %v844 = vpop.f32.mrf.mxu0
    %v845 = vadd.f32 %v831, %v844
    %v846 = vpop.f32.mrf.mxu0
    %v847 = vadd.f32 %v833, %v846
    %848 = vdwg.mxu0
    %849 = vmatpush.bf16.msra.mxu0 %v570
    %850 = vmatpush.bf16.msra.mxu0 %v568
    %851 = vmatpush.bf16.msra.mxu0 %v566
    %852 = vmatpush.bf16.msra.mxu0 %v564
    %853 = vmatpush.bf16.msra.mxu0 %v562
    %854 = vmatpush.bf16.msra.mxu0 %v560
    %855 = vmatpush.bf16.msra.mxu0 %v558
    %856 = vmatpush.bf16.msra.mxu0 %v556
    %857 = vmatmul.bf16.gmra.mxu0 %v120
    %v858 = vpop.f32.mrf.mxu0
    %v859 = vadd.f32 %v845, %v858
    %v860 = vpop.f32.mrf.mxu0
    %v861 = vadd.f32 %v847, %v860
    %862 = vdwg.mxu0
    %863 = vmatpush.bf16.msra.mxu0 %v586
    %864 = vmatpush.bf16.msra.mxu0 %v584
    %865 = vmatpush.bf16.msra.mxu0 %v582
    %866 = vmatpush.bf16.msra.mxu0 %v580
    %867 = vmatpush.bf16.msra.mxu0 %v578
    %868 = vmatpush.bf16.msra.mxu0 %v576
    %869 = vmatpush.bf16.msra.mxu0 %v574
    %870 = vmatpush.bf16.msra.mxu0 %v572
    %871 = vmatmul.bf16.gmra.mxu0 %v121
    %v872 = vpop.f32.mrf.mxu0
    %v873 = vadd.f32 %v859, %v872
    %v874 = vpop.f32.mrf.mxu0
    %v875 = vadd.f32 %v861, %v874
    %876 = vdwg.mxu0
    %877 = vmatpush.bf16.msra.mxu0 %v602
    %878 = vmatpush.bf16.msra.mxu0 %v600
    %879 = vmatpush.bf16.msra.mxu0 %v598
    %880 = vmatpush.bf16.msra.mxu0 %v596
    %881 = vmatpush.bf16.msra.mxu0 %v594
    %882 = vmatpush.bf16.msra.mxu0 %v592
    %883 = vmatpush.bf16.msra.mxu0 %v590
    %884 = vmatpush.bf16.msra.mxu0 %v588
    %885 = vmatmul.bf16.gmra.mxu0 %v122
    %v886 = vpop.f32.mrf.mxu0
    %v887 = vadd.f32 %v873, %v886
    %v888 = vpop.f32.mrf.mxu0
    %v889 = vadd.f32 %v875, %v888
    %890 = vdwg.mxu0
    %891 = vmatpush.bf16.msra.mxu0 %v618
    %892 = vmatpush.bf16.msra.mxu0 %v616
    %893 = vmatpush.bf16.msra.mxu0 %v614
    %894 = vmatpush.bf16.msra.mxu0 %v612
    %895 = vmatpush.bf16.msra.mxu0 %v610
    %896 = vmatpush.bf16.msra.mxu0 %v608
    %897 = vmatpush.bf16.msra.mxu0 %v606
    %898 = vmatpush.bf16.msra.mxu0 %v604
    %899 = vmatmul.bf16.gmra.mxu0 %v123
    %v900 = vpop.f32.mrf.mxu0
    %v901 = vadd.f32 %v887, %v900
    %v902 = vpop.f32.mrf.mxu0
    %v903 = vadd.f32 %v889, %v902
    %904 = vdwg.mxu0
    %905 = vmatpush.bf16.msra.mxu0 0
    %906 = vmatpush.bf16.msra.mxu0 0
    %907 = vmatpush.bf16.msra.mxu0 0
    %908 = vmatpush.bf16.msra.mxu0 0
    %909 = vmatpush.bf16.msra.mxu0 0
    %910 = vmatpush.bf16.msra.mxu0 0
    %911 = vmatpush.bf16.msra.mxu0 0
    %912 = vmatpush.bf16.msra.mxu0 %v620
    %913 = vmatmul.bf16.gmra.mxu0 %v721
    %v914 = vpop.f32.mrf.mxu0
    %v915 = vadd.f32 %v901, %v914
    %v916 = vpop.f32.mrf.mxu0
    %v917 = vadd.f32 %v903, %v916
    %918 = vdwg.mxu0
    %v919 = vmax.f32 %v817, 0.0
    %v920 = vmax.f32 %v915, 0.0
    %v921 = vmax.f32 %v819, 0.0
    %v922 = vmax.f32 %v917, 0.0
    %v923 = vpack.c.bf16 %v921, %v919
    %v924 = vpack.c.bf16 %v922, %v920
    %v925 = vld [vmem:[#allocation8] sm:$0xff]
    %v926 = vld [vmem:[#allocation8 + $0x8] sm:$0xff]
    %v927 = vld [vmem:[#allocation8 + $0x10] sm:$0xff]
    %v928 = vld [vmem:[#allocation8 + $0x18] sm:$0xff]
    %v929 = vld [vmem:[#allocation8 + $0x20] sm:$0xff]
    %v930 = vld [vmem:[#allocation8 + $0x28] sm:$0xff]
    %v931 = vld [vmem:[#allocation8 + $0x30] sm:$0xff]
    %v932 = vld [vmem:[#allocation8 + $0x38] sm:$0xff]
    %v933 = vld [vmem:[#allocation8 + $0x40] sm:$0xff]
    %v934 = vld [vmem:[#allocation8 + $0x48] sm:$0xff]
    %v935 = vld [vmem:[#allocation8 + $0x50] sm:$0xff]
    %v936 = vld [vmem:[#allocation8 + $0x58] sm:$0xff]
    %v937 = vld [vmem:[#allocation8 + $0x60] sm:$0xff]
    %v938 = vld [vmem:[#allocation8 + $0x68] sm:$0xff]
    %v939 = vld [vmem:[#allocation8 + $0x70] sm:$0xff]
    %v940 = vld [vmem:[#allocation8 + $0x78] sm:$0xff]
    %v941 = vld [vmem:[#allocation8 + $0x80] sm:$0xff]
    %v942 = vld [vmem:[#allocation8 + $0x88] sm:$0xff]
    %v943 = vld [vmem:[#allocation8 + $0x90] sm:$0xff]
    %v944 = vld [vmem:[#allocation8 + $0x98] sm:$0xff]
    %v945 = vld [vmem:[#allocation8 + $0xa0] sm:$0xff]
    %v946 = vld [vmem:[#allocation8 + $0xa8] sm:$0xff]
    %v947 = vld [vmem:[#allocation8 + $0xb0] sm:$0xff]
    %v948 = vld [vmem:[#allocation8 + $0xb8] sm:$0xff]
    %v949 = vld [vmem:[#allocation8 + $0xc0] sm:$0xff]
    %v950 = vld [vmem:[#allocation8 + $0xc8] sm:$0xff]
    %v951 = vld [vmem:[#allocation8 + $0xd0] sm:$0xff]
    %v952 = vld [vmem:[#allocation8 + $0xd8] sm:$0xff]
    %v953 = vld [vmem:[#allocation8 + $0xe0] sm:$0xff]
    %v954 = vld [vmem:[#allocation8 + $0xe8] sm:$0xff]
    %v955 = vld [vmem:[#allocation8 + $0xf0] sm:$0xff]
    %v956 = vld [vmem:[#allocation8 + $0xf8] sm:$0xff]
    %v957 = vld [vmem:[%s4] sm:$0x3]
    %v959 = vperm.slane %v957, 0
    %v960 = vperm.slane %v957, 1
    %v995 = vunpack.c.l.b16 %v925
    %v996 = vunpack.c.h.b16 %v925
    %v997 = vunpack.c.l.b16 %v926
    %v998 = vunpack.c.h.b16 %v926
    %v999 = vunpack.c.l.b16 %v927
    %v1000 = vunpack.c.h.b16 %v927
    %v1001 = vunpack.c.l.b16 %v928
    %v1002 = vunpack.c.h.b16 %v928
    %v1003 = vunpack.c.l.b16 %v929
    %v1004 = vunpack.c.h.b16 %v929
    %v1005 = vunpack.c.l.b16 %v930
    %v1006 = vunpack.c.h.b16 %v930
    %v1007 = vunpack.c.l.b16 %v931
    %v1008 = vunpack.c.h.b16 %v931
    %v1009 = vunpack.c.l.b16 %v932
    %v1010 = vunpack.c.h.b16 %v932
    %v1011 = vunpack.c.l.b16 %v933
    %v1012 = vunpack.c.h.b16 %v933
    %v1013 = vunpack.c.l.b16 %v934
    %v1014 = vunpack.c.h.b16 %v934
    %v1015 = vunpack.c.l.b16 %v935
    %v1016 = vunpack.c.h.b16 %v935
    %v1017 = vunpack.c.l.b16 %v936
    %v1018 = vunpack.c.h.b16 %v936
    %v1019 = vunpack.c.l.b16 %v937
    %v1020 = vunpack.c.h.b16 %v937
    %v1021 = vunpack.c.l.b16 %v938
    %v1022 = vunpack.c.h.b16 %v938
    %v1023 = vunpack.c.l.b16 %v939
    %v1024 = vunpack.c.h.b16 %v939
    %v1025 = vunpack.c.l.b16 %v940
    %v1026 = vunpack.c.h.b16 %v940
    %v1027 = vunpack.c.l.b16 %v941
    %v1028 = vunpack.c.h.b16 %v941
    %v1029 = vunpack.c.l.b16 %v942
    %v1030 = vunpack.c.h.b16 %v942
    %v1031 = vunpack.c.l.b16 %v943
    %v1032 = vunpack.c.h.b16 %v943
    %v1033 = vunpack.c.l.b16 %v944
    %v1034 = vunpack.c.h.b16 %v944
    %v1035 = vunpack.c.l.b16 %v945
    %v1036 = vunpack.c.h.b16 %v945
    %v1037 = vunpack.c.l.b16 %v946
    %v1038 = vunpack.c.h.b16 %v946
    %v1039 = vunpack.c.l.b16 %v947
    %v1040 = vunpack.c.h.b16 %v947
    %v1041 = vunpack.c.l.b16 %v948
    %v1042 = vunpack.c.h.b16 %v948
    %v1043 = vunpack.c.l.b16 %v949
    %v1044 = vunpack.c.h.b16 %v949
    %v1045 = vunpack.c.l.b16 %v950
    %v1046 = vunpack.c.h.b16 %v950
    %v1047 = vunpack.c.l.b16 %v951
    %v1048 = vunpack.c.h.b16 %v951
    %v1049 = vunpack.c.l.b16 %v952
    %v1050 = vunpack.c.h.b16 %v952
    %v1051 = vunpack.c.l.b16 %v953
    %v1052 = vunpack.c.h.b16 %v953
    %v1053 = vunpack.c.l.b16 %v954
    %v1054 = vunpack.c.h.b16 %v954
    %v1055 = vunpack.c.l.b16 %v955
    %v1056 = vunpack.c.h.b16 %v955
    %v1057 = vunpack.c.l.b16 %v956
    %v1058 = vunpack.c.h.b16 %v956
    %v1059 = vpack.c.b16 %v997, %v995
    %v1060 = vpack.c.b16 %v998, %v996
    %v1061 = vpack.c.b16 %v1001, %v999
    %v1062 = vpack.c.b16 %v1002, %v1000
    %v1063 = vpack.c.b16 %v1005, %v1003
    %v1064 = vpack.c.b16 %v1006, %v1004
    %v1065 = vpack.c.b16 %v1009, %v1007
    %v1066 = vpack.c.b16 %v1010, %v1008
    %v1067 = vpack.c.b16 %v1013, %v1011
    %v1068 = vpack.c.b16 %v1014, %v1012
    %v1069 = vpack.c.b16 %v1017, %v1015
    %v1070 = vpack.c.b16 %v1018, %v1016
    %v1071 = vpack.c.b16 %v1021, %v1019
    %v1072 = vpack.c.b16 %v1022, %v1020
    %v1073 = vpack.c.b16 %v1025, %v1023
    %v1074 = vpack.c.b16 %v1026, %v1024
    %v1075 = vpack.c.b16 %v1029, %v1027
    %v1076 = vpack.c.b16 %v1030, %v1028
    %v1077 = vpack.c.b16 %v1033, %v1031
    %v1078 = vpack.c.b16 %v1034, %v1032
    %v1079 = vpack.c.b16 %v1037, %v1035
    %v1080 = vpack.c.b16 %v1038, %v1036
    %v1081 = vpack.c.b16 %v1041, %v1039
    %v1082 = vpack.c.b16 %v1042, %v1040
    %v1083 = vpack.c.b16 %v1045, %v1043
    %v1084 = vpack.c.b16 %v1046, %v1044
    %v1085 = vpack.c.b16 %v1049, %v1047
    %v1086 = vpack.c.b16 %v1050, %v1048
    %v1087 = vpack.c.b16 %v1053, %v1051
    %v1088 = vpack.c.b16 %v1054, %v1052
    %v1089 = vpack.c.b16 %v1057, %v1055
    %v1090 = vpack.c.b16 %v1058, %v1056
    %1123 = vmatpush.bf16.msra.mxu0 %v1073
    %1124 = vmatpush.bf16.msra.mxu0 %v1071
    %1125 = vmatpush.bf16.msra.mxu0 %v1069
    %1126 = vmatpush.bf16.msra.mxu0 %v1067
    %1127 = vmatpush.bf16.msra.mxu0 %v1065
    %1128 = vmatpush.bf16.msra.mxu0 %v1063
    %1129 = vmatpush.bf16.msra.mxu0 %v1061
    %1130 = vmatpush.bf16.msra.mxu0 %v1059
    %1131 = vmatmul.bf16.gmra.mxu0 %v923
    %v1132 = vpop.f32.mrf.mxu0
    %v1133 = vadd.f32 %v959, %v1132
    %v1134 = vpop.f32.mrf.mxu0
    %v1135 = vadd.f32 %v959, %v1134
    %1136 = vdwg.mxu0
    %1137 = vmatpush.bf16.msra.mxu0 %v1089
    %1138 = vmatpush.bf16.msra.mxu0 %v1087
    %1139 = vmatpush.bf16.msra.mxu0 %v1085
    %1140 = vmatpush.bf16.msra.mxu0 %v1083
    %1141 = vmatpush.bf16.msra.mxu0 %v1081
    %1142 = vmatpush.bf16.msra.mxu0 %v1079
    %1143 = vmatpush.bf16.msra.mxu0 %v1077
    %1144 = vmatpush.bf16.msra.mxu0 %v1075
    %1145 = vmatmul.bf16.gmra.mxu0 %v924
    %v1146 = vpop.f32.mrf.mxu0
    %v1147 = vadd.f32 %v1133, %v1146
    %v1148 = vpop.f32.mrf.mxu0
    %v1149 = vadd.f32 %v1135, %v1148
    %1150 = vdwg.mxu0
    %1151 = vmatpush.bf16.msra.mxu0 %v1074
    %1152 = vmatpush.bf16.msra.mxu0 %v1072
    %1153 = vmatpush.bf16.msra.mxu0 %v1070
    %1154 = vmatpush.bf16.msra.mxu0 %v1068
    %1155 = vmatpush.bf16.msra.mxu0 %v1066
    %1156 = vmatpush.bf16.msra.mxu0 %v1064
    %1157 = vmatpush.bf16.msra.mxu0 %v1062
    %1158 = vmatpush.bf16.msra.mxu0 %v1060
    %1159 = vmatmul.bf16.gmra.mxu0 %v923
    %v1160 = vpop.f32.mrf.mxu0
    %v1161 = vadd.f32 %v960, %v1160
    %v1162 = vpop.f32.mrf.mxu0
    %v1163 = vadd.f32 %v960, %v1162
    %1164 = vdwg.mxu0
    %1165 = vmatpush.bf16.msra.mxu0 %v1090
    %1166 = vmatpush.bf16.msra.mxu0 %v1088
    %1167 = vmatpush.bf16.msra.mxu0 %v1086
    %1168 = vmatpush.bf16.msra.mxu0 %v1084
    %1169 = vmatpush.bf16.msra.mxu0 %v1082
    %1170 = vmatpush.bf16.msra.mxu0 %v1080
    %1171 = vmatpush.bf16.msra.mxu0 %v1078
    %1172 = vmatpush.bf16.msra.mxu0 %v1076
    %1173 = vmatmul.bf16.gmra.mxu0 %v924
    %v1174 = vpop.f32.mrf.mxu0
    %v1175 = vadd.f32 %v1161, %v1174
    %v1176 = vpop.f32.mrf.mxu0
    %v1177 = vadd.f32 %v1163, %v1176
    %1178 = vdwg.mxu0
    %v1179 = vmax.f32 %v1147, 0.0
    %v1180 = vmax.f32 %v1175, 0.0
    %v1181 = vmax.f32 %v1149, 0.0
    %v1182 = vmax.f32 %v1177, 0.0
    %v1183 = vpack.c.bf16 %v1181, %v1179
    %v1184 = vpack.c.bf16 %v1182, %v1180
    %v1185 = vld [vmem:[#allocation10] sm:$0xf]
    %v1186 = vld [vmem:[#allocation10 + $0x4] sm:$0xf]
    %v1187 = vld [vmem:[#allocation10 + $0x8] sm:$0xf]
    %v1188 = vld [vmem:[#allocation10 + $0xc] sm:$0xf]
    %v1189 = vld [vmem:[#allocation10 + $0x10] sm:$0xf]
    %v1190 = vld [vmem:[#allocation10 + $0x14] sm:$0xf]
    %v1191 = vld [vmem:[#allocation10 + $0x18] sm:$0xf]
    %v1192 = vld [vmem:[#allocation10 + $0x1c] sm:$0xf]
    %v1193 = vld [vmem:[#allocation10 + $0x20] sm:$0xf]
    %v1194 = vld [vmem:[#allocation10 + $0x24] sm:$0xf]
    %v1195 = vld [vmem:[#allocation10 + $0x28] sm:$0xf]
    %v1196 = vld [vmem:[#allocation10 + $0x2c] sm:$0xf]
    %v1197 = vld [vmem:[#allocation10 + $0x30] sm:$0xf]
    %v1198 = vld [vmem:[#allocation10 + $0x34] sm:$0xf]
    %v1199 = vld [vmem:[#allocation10 + $0x38] sm:$0xf]
    %v1200 = vld [vmem:[#allocation10 + $0x3c] sm:$0xf]
    %v1201 = vld [vmem:[#allocation10 + $0x40] sm:$0xf]
    %v1202 = vld [vmem:[#allocation10 + $0x44] sm:$0xf]
    %v1203 = vld [vmem:[#allocation10 + $0x48] sm:$0xf]
    %v1204 = vld [vmem:[#allocation10 + $0x4c] sm:$0xf]
    %v1205 = vld [vmem:[#allocation10 + $0x50] sm:$0xf]
    %v1206 = vld [vmem:[#allocation10 + $0x54] sm:$0xf]
    %v1207 = vld [vmem:[#allocation10 + $0x58] sm:$0xf]
    %v1208 = vld [vmem:[#allocation10 + $0x5c] sm:$0xf]
    %v1209 = vld [vmem:[#allocation10 + $0x60] sm:$0xf]
    %v1210 = vld [vmem:[#allocation10 + $0x64] sm:$0xf]
    %v1211 = vld [vmem:[#allocation10 + $0x68] sm:$0xf]
    %v1212 = vld [vmem:[#allocation10 + $0x6c] sm:$0xf]
    %v1213 = vld [vmem:[#allocation10 + $0x70] sm:$0xf]
    %v1214 = vld [vmem:[#allocation10 + $0x74] sm:$0xf]
    %v1215 = vld [vmem:[#allocation10 + $0x78] sm:$0xf]
    %v1216 = vld [vmem:[#allocation10 + $0x7c] sm:$0xf]
    %v1217 = vld [vmem:[%s6] sm:$0x1]
    %v1219 = vperm.slane %v1217, 0
    %v1253 = vunpack.c.l.b16 %v1185
    %v1254 = vunpack.c.l.b16 %v1186
    %v1255 = vunpack.c.l.b16 %v1187
    %v1256 = vunpack.c.l.b16 %v1188
    %v1257 = vunpack.c.l.b16 %v1189
    %v1258 = vunpack.c.l.b16 %v1190
    %v1259 = vunpack.c.l.b16 %v1191
    %v1260 = vunpack.c.l.b16 %v1192
    %v1261 = vunpack.c.l.b16 %v1193
    %v1262 = vunpack.c.l.b16 %v1194
    %v1263 = vunpack.c.l.b16 %v1195
    %v1264 = vunpack.c.l.b16 %v1196
    %v1265 = vunpack.c.l.b16 %v1197
    %v1266 = vunpack.c.l.b16 %v1198
    %v1267 = vunpack.c.l.b16 %v1199
    %v1268 = vunpack.c.l.b16 %v1200
    %v1269 = vunpack.c.l.b16 %v1201
    %v1270 = vunpack.c.l.b16 %v1202
    %v1271 = vunpack.c.l.b16 %v1203
    %v1272 = vunpack.c.l.b16 %v1204
    %v1273 = vunpack.c.l.b16 %v1205
    %v1274 = vunpack.c.l.b16 %v1206
    %v1275 = vunpack.c.l.b16 %v1207
    %v1276 = vunpack.c.l.b16 %v1208
    %v1277 = vunpack.c.l.b16 %v1209
    %v1278 = vunpack.c.l.b16 %v1210
    %v1279 = vunpack.c.l.b16 %v1211
    %v1280 = vunpack.c.l.b16 %v1212
    %v1281 = vunpack.c.l.b16 %v1213
    %v1282 = vunpack.c.l.b16 %v1214
    %v1283 = vunpack.c.l.b16 %v1215
    %v1284 = vunpack.c.l.b16 %v1216
    %v1285 = vpack.c.b16 %v1254, %v1253
    %v1286 = vpack.c.b16 %v1256, %v1255
    %v1287 = vpack.c.b16 %v1258, %v1257
    %v1288 = vpack.c.b16 %v1260, %v1259
    %v1289 = vpack.c.b16 %v1262, %v1261
    %v1290 = vpack.c.b16 %v1264, %v1263
    %v1291 = vpack.c.b16 %v1266, %v1265
    %v1292 = vpack.c.b16 %v1268, %v1267
    %v1293 = vpack.c.b16 %v1270, %v1269
    %v1294 = vpack.c.b16 %v1272, %v1271
    %v1295 = vpack.c.b16 %v1274, %v1273
    %v1296 = vpack.c.b16 %v1276, %v1275
    %v1297 = vpack.c.b16 %v1278, %v1277
    %v1298 = vpack.c.b16 %v1280, %v1279
    %v1299 = vpack.c.b16 %v1282, %v1281
    %v1300 = vpack.c.b16 %v1284, %v1283
    %1317 = vmatpush.bf16.msra.mxu0 %v1292
    %1318 = vmatpush.bf16.msra.mxu0 %v1291
    %1319 = vmatpush.bf16.msra.mxu0 %v1290
    %1320 = vmatpush.bf16.msra.mxu0 %v1289
    %1321 = vmatpush.bf16.msra.mxu0 %v1288
    %1322 = vmatpush.bf16.msra.mxu0 %v1287
    %1323 = vmatpush.bf16.msra.mxu0 %v1286
    %1324 = vmatpush.bf16.msra.mxu0 %v1285
    %1325 = vmatmul.bf16.gmra.mxu0 %v1183
    %v1326 = vpop.f32.mrf.mxu0
    %v1327 = vadd.f32 %v1219, %v1326
    %v1328 = vpop.f32.mrf.mxu0
    %v1329 = vadd.f32 %v1219, %v1328
    %1330 = vdwg.mxu0
    %1331 = vmatpush.bf16.msra.mxu0 %v1300
    %1332 = vmatpush.bf16.msra.mxu0 %v1299
    %1333 = vmatpush.bf16.msra.mxu0 %v1298
    %1334 = vmatpush.bf16.msra.mxu0 %v1297
    %1335 = vmatpush.bf16.msra.mxu0 %v1296
    %1336 = vmatpush.bf16.msra.mxu0 %v1295
    %1337 = vmatpush.bf16.msra.mxu0 %v1294
    %1338 = vmatpush.bf16.msra.mxu0 %v1293
    %1339 = vmatmul.bf16.gmra.mxu0 %v1184
    %v1340 = vpop.f32.mrf.mxu0
    %v1341 = vadd.f32 %v1327, %v1340
    %v1342 = vpop.f32.mrf.mxu0
    %v1343 = vadd.f32 %v1329, %v1342
    %1344 = vdwg.mxu0
    %v1345 = vpack.c.bf16 %v1341, %v1341
    %v1346 = vpack.c.bf16 %v1343, %v1343
    %1347 = vst [vmem:[#allocation11] sm:$0xf] %v1345
    %1348 = vst [vmem:[#allocation11 + $0x4] sm:$0xf] %v1346
    // Predicated region
    $region50: #{tpu_custom_call.1} parent=1 // pred_check
      _
    $region51: #{tpu_custom_call.1} parent=1 // pred_check_branch
      %1350 = sbr.rel (0) target = $region53
    $region52: #{tpu_custom_call.1} parent=1 // pred_region
      %1352 = vsyncadd [#allocation4], 0
      %s1353 = sshll.u32 [#allocation11], 4
      %s1354 = int_to_ptr.vmem [resolvable:$true] %s1353
      %s1355 = sshll.u32 %s7, 4
      %s1356 = int_to_ptr.hbm [resolvable:$true] %s1355
      %1361 = dma.vmem_to_hbm [thread:$0]  %s1354, 128, %s1356, [#allocation4], 64, 64, 4
    $region53: #{tpu_custom_call.1} parent=1 // pred_fallthru
      _
    // Predicated region
    $region54: #{tpu_custom_call.1} parent=1 // pred_check
      _
    $region55: #{tpu_custom_call.1} parent=1 // pred_check_branch
      %1363 = sbr.rel (0) target = $region57
    $region56: #{tpu_custom_call.1} parent=1 // pred_region
      %1365 = dma.done [#allocation4], 128
    $region57: #{tpu_custom_call.1} parent=1 // pred_fallthru
      _
    %1366 = vsyncpa [#allocation3], 1
    %1367 = vsyncpa [#allocation6], 1
    %1368 = vsyncpa [#allocation9], 1
    %1369 = vsyncpa [#allocation4], 1

</llo_original>
